<compile_context>
chip_gen: v5e
topology: v5e:2x2
jax: 0.10.0
libtpu: 0.0.40
codegen_flags: <defaults>
</compile_context>

<pallas_src>
import functools

import jax
import jax.numpy as jnp
from jax.experimental import pallas as pl
from jax.experimental.pallas import tpu as pltpu

# 2 inputs x 2 pipeline buffers of (row_tile, C) must fit this budget.
_TILE_VMEM_BUDGET = 24 * 1024 * 1024
# Raise the scoped VMEM limit (v5e default is 16 MiB); still under v7x's 64 MiB.
_VMEM_LIMIT_BYTES = 48 * 1024 * 1024


def _soft_ce_kernel(x_ref, t_ref, loss_ref, *, temp_t: float, temp_s: float):
    # x_ref, t_ref: (row_tile, C) tiles in VMEM (input dtype); loss_ref: (row_tile, 1) f32.
    x = x_ref[...].astype(jnp.float32) * jnp.float32(1.0 / temp_s)
    t = t_ref[...].astype(jnp.float32) * jnp.float32(1.0 / temp_t)

    # Unnormalized target softmax weights (normalization folded into the end).
    t_max = jnp.max(t, axis=-1, keepdims=True)
    t_exp = jnp.exp(t - t_max)
    t_den = jnp.sum(t_exp, axis=-1, keepdims=True)

    # log_softmax(x / temp_s) along the class (last / lane) axis.
    x_max = jnp.max(x, axis=-1, keepdims=True)
    x_sh = x - x_max
    lse = jnp.log(jnp.sum(jnp.exp(x_sh), axis=-1, keepdims=True))
    log_sm = x_sh - lse

    # loss = -(sum_j t_exp_j * log_sm_j) / (sum_j t_exp_j)
    # Exact divide (one scalar per row): approx reciprocal was not accurate
    # enough for per-row outputs and the kernel is HBM-bound anyway.
    s = jnp.sum(t_exp * log_sm, axis=-1, keepdims=True)
    loss_ref[...] = -(s / t_den)


def _choose_row_tile(B: int, C: int, itemsize: int) -> int:
    """Biggest row tile (multiple of 8) whose double-buffered inputs fit the VMEM budget."""
    bytes_per_row = 2 * 2 * C * itemsize          # 2 inputs x 2 pipeline buffers
    tile = _TILE_VMEM_BUDGET // max(bytes_per_row, 1)
    tile = max(8, min(2048, (tile // 8) * 8))
    b8 = 8 * ((B + 7) // 8)
    if tile >= b8:
        # Whole batch would be a single grid step; split into >= 2 steps when
        # possible so v7x's two TensorCores both get work.
        tile = max(8, ((b8 // 2) // 8) * 8)
    return int(tile)


def soft_target_cross_entropy_v2(x, target, temp_t=1.0, temp_s=1.0, mean=True):
    """x, target: (..., C) arrays (any float dtype; NOT upcast before the kernel).

    Returns a scalar (mean=True) or a per-row f32 loss array with the leading
    shape of x (mean=False).
    """
    assert x.shape == target.shape and x.ndim >= 2
    *lead, C = x.shape
    B = 1
    for d in lead:
        B *= d
    x2 = x.reshape(B, C)
    t2 = target.reshape(B, C)
    itemsize = jnp.dtype(x2.dtype).itemsize

    # TODO(synk): for very large C (e.g. LM-head vocab) add a class-axis grid
    # dimension with an online-LSE accumulator instead of a full-C tile.
    row_tile = _choose_row_tile(B, C, itemsize)

    # cdiv + zero padding instead of requiring B % row_tile == 0.
    num_tiles = pl.cdiv(B, row_tile)
    B_pad = num_tiles * row_tile
    if B_pad != B:
        pad = ((0, B_pad - B), (0, 0))
        x2 = jnp.pad(x2, pad)
        t2 = jnp.pad(t2, pad)

    kernel = functools.partial(_soft_ce_kernel,
                               temp_t=float(temp_t), temp_s=float(temp_s))

    per_row = pl.pallas_call(
        kernel,
        out_shape=jax.ShapeDtypeStruct((B_pad, 1), jnp.float32),
        grid_spec=pltpu.PrefetchScalarGridSpec(
            num_scalar_prefetch=0,
            grid=(num_tiles,),
            in_specs=[
                pl.BlockSpec((row_tile, C), lambda i: (i, 0)),
                pl.BlockSpec((row_tile, C), lambda i: (i, 0)),
            ],
            out_specs=pl.BlockSpec((row_tile, 1), lambda i: (i, 0)),
        ),
        compiler_params=pltpu.CompilerParams(
            dimension_semantics=("parallel",),
            vmem_limit_bytes=_VMEM_LIMIT_BYTES,
        ),
    )(x2, t2)

    per_row = per_row[:B, 0]
    if mean:
        return jnp.mean(per_row)
    return per_row.reshape(lead)


def _reference(x, target, temp_t=1.0, temp_s=1.0, mean=True):
    t_sm = jax.nn.softmax(target.astype(jnp.float32) / temp_t, axis=-1)
    log_sm = jax.nn.log_softmax(x.astype(jnp.float32) / temp_s, axis=-1)
    loss = jnp.sum(-t_sm * log_sm, axis=-1)
    return jnp.mean(loss) if mean else loss


if __name__ == "__main__":
    key = jax.random.PRNGKey(0)
    kx, kt = jax.random.split(key)

    B, C = 16, 32            # batch of 16 samples, 32 classes
    temp_t, temp_s = 1.0, 1.0

    x = jax.random.normal(kx, (B, C), dtype=jnp.float32)
    target = jax.random.normal(kt, (B, C), dtype=jnp.float32)

    # mean=True path (f32 inputs)
    out = jax.block_until_ready(
        soft_target_cross_entropy_v2(x, target, temp_t, temp_s, mean=True))
    ref = _reference(x, target, temp_t, temp_s, mean=True)
    assert jnp.allclose(out, ref, atol=2e-3, rtol=2e-3), (out, ref)

    # mean=False (per-row) path
    out_rows = jax.block_until_ready(
        soft_target_cross_entropy_v2(x, target, temp_t, temp_s, mean=False))
    ref_rows = _reference(x, target, temp_t, temp_s, mean=False)
    assert jnp.allclose(out_rows, ref_rows, atol=2e-3, rtol=2e-3), (out_rows, ref_rows)

    # bf16 inputs stay bf16 across the HBM boundary (half the DMA bytes)
    xb, tb = x.astype(jnp.bfloat16), target.astype(jnp.bfloat16)
    out_bf = jax.block_until_ready(
        soft_target_cross_entropy_v2(xb, tb, temp_t, temp_s, mean=True))
    ref_bf = _reference(xb, tb, temp_t, temp_s, mean=True)
    assert jnp.allclose(out_bf, ref_bf, atol=2e-3, rtol=2e-3), (out_bf, ref_bf)

    # batch not a multiple of 8 (exercises the cdiv + padding path)
    out_odd = jax.block_until_ready(
        soft_target_cross_entropy_v2(x[:13], target[:13], temp_t, temp_s, mean=False))
    ref_odd = _reference(x[:13], target[:13], temp_t, temp_s, mean=False)
    assert jnp.allclose(out_odd, ref_odd, atol=2e-3, rtol=2e-3), (out_odd, ref_odd)

    # non-default temperatures
    out_tmp = jax.block_until_ready(
        soft_target_cross_entropy_v2(x, target, 2.0, 0.5, mean=True))
    ref_tmp = _reference(x, target, 2.0, 0.5, mean=True)
    assert jnp.allclose(out_tmp, ref_tmp, atol=2e-3, rtol=2e-3), (out_tmp, ref_tmp)

    print("KERNEL_OK")
</pallas_src>

<mosaic_0001>
module attributes {stable_mosaic.version = 11 : i64} {
  func.func @_soft_ce_kernel(%arg0: i32, %arg1: memref<8x32xf32, #tpu.memory_space<vmem>>, %arg2: memref<8x32xf32, #tpu.memory_space<vmem>>, %arg3: memref<8x1xf32, #tpu.memory_space<vmem>>) attributes {dimension_semantics = [#tpu.dimension_semantics<parallel>], iteration_bounds = array<i64: 2>, scalar_prefetch = 0 : i64, scratch_operands = 0 : i64, tpu.core_type = #tpu.core_type<tc>, window_params = [{transform_indices = @transform_0, window_bounds = array<i64: 8, 32>}, {transform_indices = @transform_1, window_bounds = array<i64: 8, 32>}, {transform_indices = @transform_2, window_bounds = array<i64: 8, 1>}]} {
    %c0 = arith.constant 0 : index
    %c0_0 = arith.constant 0 : index
    %0 = vector.load %arg1[%c0, %c0_0] : memref<8x32xf32, #tpu.memory_space<vmem>>, vector<8x32xf32>
    %cst = arith.constant 1.000000e+00 : f32
    %1 = vector.broadcast %cst : f32 to vector<8x32xf32>
    %2 = arith.mulf %0, %1 : vector<8x32xf32>
    %c0_1 = arith.constant 0 : index
    %c0_2 = arith.constant 0 : index
    %3 = vector.load %arg2[%c0_1, %c0_2] : memref<8x32xf32, #tpu.memory_space<vmem>>, vector<8x32xf32>
    %cst_3 = arith.constant 1.000000e+00 : f32
    %4 = vector.broadcast %cst_3 : f32 to vector<8x32xf32>
    %5 = arith.mulf %3, %4 : vector<8x32xf32>
    %cst_4 = arith.constant dense<0xFF800000> : vector<8xf32>
    %6 = vector.multi_reduction <maximumf>, %5, %cst_4 [1] : vector<8x32xf32> to vector<8xf32>
    %7 = vector.shape_cast %6 : vector<8xf32> to vector<8x1xf32>
    %8 = vector.broadcast %7 : vector<8x1xf32> to vector<8x32xf32>
    %9 = arith.subf %5, %8 : vector<8x32xf32>
    %10 = math.exp %9 : vector<8x32xf32>
    %cst_5 = arith.constant dense<0.000000e+00> : vector<8xf32>
    %11 = vector.multi_reduction <add>, %10, %cst_5 [1] : vector<8x32xf32> to vector<8xf32>
    %12 = vector.shape_cast %11 : vector<8xf32> to vector<8x1xf32>
    %cst_6 = arith.constant dense<0xFF800000> : vector<8xf32>
    %13 = vector.multi_reduction <maximumf>, %2, %cst_6 [1] : vector<8x32xf32> to vector<8xf32>
    %14 = vector.shape_cast %13 : vector<8xf32> to vector<8x1xf32>
    %15 = vector.broadcast %14 : vector<8x1xf32> to vector<8x32xf32>
    %16 = arith.subf %2, %15 : vector<8x32xf32>
    %17 = math.exp %16 : vector<8x32xf32>
    %cst_7 = arith.constant dense<0.000000e+00> : vector<8xf32>
    %18 = vector.multi_reduction <add>, %17, %cst_7 [1] : vector<8x32xf32> to vector<8xf32>
    %19 = vector.shape_cast %18 : vector<8xf32> to vector<8x1xf32>
    %20 = math.log %19 : vector<8x1xf32>
    %21 = vector.broadcast %20 : vector<8x1xf32> to vector<8x32xf32>
    %22 = arith.subf %16, %21 : vector<8x32xf32>
    %23 = arith.mulf %10, %22 : vector<8x32xf32>
    %cst_8 = arith.constant dense<0.000000e+00> : vector<8xf32>
    %24 = vector.multi_reduction <add>, %23, %cst_8 [1] : vector<8x32xf32> to vector<8xf32>
    %25 = vector.shape_cast %24 : vector<8xf32> to vector<8x1xf32>
    %26 = arith.divf %25, %12 : vector<8x1xf32>
    %cst_9 = arith.constant 0.000000e+00 : f32
    %27 = vector.broadcast %cst_9 : f32 to vector<8x1xf32>
    %28 = arith.subf %27, %26 : vector<8x1xf32>
    %c0_10 = arith.constant 0 : index
    %c0_11 = arith.constant 0 : index
    %29 = vector.load %arg3[%c0_10, %c0_11] : memref<8x1xf32, #tpu.memory_space<vmem>>, vector<8x1xf32>
    tpu.vector_store %arg3[%c0_10, %c0_11], %28 {strides = array<i32>} : memref<8x1xf32, #tpu.memory_space<vmem>>, vector<8x1xf32>,
    return
  }
  func.func @transform_0(%arg0: i32) -> (i32, i32) {
    %c0_i32 = arith.constant 0 : i32
    %c0_i32_0 = arith.constant 0 : i32
    return %arg0, %c0_i32 : i32, i32
  }
  func.func @transform_1(%arg0: i32) -> (i32, i32) {
    %c0_i32 = arith.constant 0 : i32
    %c0_i32_0 = arith.constant 0 : i32
    return %arg0, %c0_i32 : i32, i32
  }
  func.func @transform_2(%arg0: i32) -> (i32, i32) {
    %c0_i32 = arith.constant 0 : i32
    %c0_i32_0 = arith.constant 0 : i32
    return %arg0, %c0_i32 : i32, i32
  }
}

</mosaic_0001>

<llo_original>
// kernel: tpu_custom_call.1
$region0: #{tpu_custom_call.1}
  #allocation0 [shape = 'u32[]', space=smem, size = 0x4, offset = 0x4, fixed_abs, tag = 'smem constant byte address 0x4 - core index']
  #allocation1 [shape = 'u32[72,128]{1,0:T(1,128)}', space=vmem, size = 0x9000, scoped, tag = 'internal scratch']
  %s0 = inlined_call_operand.hbm [shape: f32[16,32], index: 0, kind: input, shape index: {}]
  %s1 = inlined_call_operand.hbm [shape: f32[16,32], index: 1, kind: input, shape index: {}]
  %s2 = inlined_call_operand.vmem [shape: f32[16,1], index: 2, kind: output, shape index: {}]
  %s3 = sld [smem:[#allocation0]]
  $region49: #{tpu_custom_call.1} parent=0
    _
  %s5 = ssub.s32 1, %s3
  %s6 = scalar_select 0, %s5, %s3
  $region1: #{tpu_custom_call.1} parent=0
    #allocation2 [shape = 'u8[8192]{0}', space=vmem, size = 0x2000, scoped, tag = 'input window, operand 0']
    #allocation3 [shape = 's32[2]{0}', space=sflag, size = 0x8, scoped, tag = 'scoped memory for tpu_custom_call.1']
    #allocation4 [shape = 'u8[8192]{0}', space=vmem, size = 0x2000, scoped, tag = 'input window, operand 1']
    #allocation5 [shape = 's32[2]{0}', space=sflag, size = 0x8, scoped, tag = 'scoped memory for tpu_custom_call.1']
    %7 = vsyncpa [#allocation3], 0
    %s8 = scalar_lea.sflag [#allocation3], 1
    %9 = vsyncpa %s8, 0
    %10 = vsyncpa [#allocation5], 0
    %s11 = scalar_lea.sflag [#allocation5], 1
    %12 = vsyncpa %s11, 0
    loop: start=0, step=1, limit=4
    $region2: #{tpu_custom_call.1} parent=1 // loop_pre_header
      _
    $region3: #{tpu_custom_call.1} parent=1 // loop_header
      %s14 = sphi 0, %s18
      %p15 = scmp.ge.s32.totalorder %s14, 4
      %s24 = sphi 0, %s26
      %s27 = sphi 0, %s24
      %s28 = sphi 0, %s27
      %s44 = sphi 0, %s28
      %s50 = sphi 0, %s52
      %s53 = sphi 0, %s50
      %s54 = sphi 0, %s53
      %s70 = sphi 0, %s54
      %s76 = sphi 0, %s78
      %s79 = sphi 0, %s76
      %s80 = sphi 0, %s79
      %s96 = sphi 0, %s80
    $region4: #{tpu_custom_call.1} parent=1 // loop_header_branch
      %17 = sbr.rel (%p15) target = $region8
    $region5: #{tpu_custom_call.1} parent=1 // loop_body
      %s19 = ssub.s32 %s14, 1
      %s20 = ssub.s32 %s14, 2
      %s21 = sadd.s32 %s14, 1
      %s22 = ssub.s32 %s14, %s21
      %p23 = scmp.eq.s32.totalorder %s22, 0
      %s25 = sadd.s32 %s24, 1
      %s26 = scalar_select %p23, %s24, %s25
      %p29 = pneg %p23
      %p30 = scmp.eq.s32.totalorder %s14, 1
      %p31 = por %p29, %p30
      %p32 = scmp.ne.s32.totalorder %s24, %s27
      %p33 = scmp.eq.s32.totalorder %s14, 0
      %p34 = por %p32, %p33
      %p35 = scmp.ne.s32.totalorder %s24, %s27
      %p36 = scmp.eq.s32.totalorder %s19, 1
      %p37 = por %p35, %p36
      %p38 = scmp.ne.s32.totalorder %s27, %s28
      %p39 = scmp.eq.s32.totalorder %s19, 0
      %p40 = por %p38, %p39
      %p41 = scmp.ne.s32.totalorder %s27, %s28
      %p42 = scmp.eq.s32.totalorder %s20, 1
      %p43 = por %p41, %p42
      %p45 = scmp.ne.s32.totalorder %s28, %s44
      %p46 = scmp.eq.s32.totalorder %s20, 0
      %p47 = por %p45, %p46
      %s48 = ssub.s32 %s14, %s21
      %p49 = scmp.eq.s32.totalorder %s48, 0
      %s51 = sadd.s32 %s50, 1
      %s52 = scalar_select %p49, %s50, %s51
      %p55 = pneg %p49
      %p56 = scmp.eq.s32.totalorder %s14, 1
      %p57 = por %p55, %p56
      %p58 = scmp.ne.s32.totalorder %s50, %s53
      %p59 = scmp.eq.s32.totalorder %s14, 0
      %p60 = por %p58, %p59
      %p61 = scmp.ne.s32.totalorder %s50, %s53
      %p62 = scmp.eq.s32.totalorder %s19, 1
      %p63 = por %p61, %p62
      %p64 = scmp.ne.s32.totalorder %s53, %s54
      %p65 = scmp.eq.s32.totalorder %s19, 0
      %p66 = por %p64, %p65
      %p67 = scmp.ne.s32.totalorder %s53, %s54
      %p68 = scmp.eq.s32.totalorder %s20, 1
      %p69 = por %p67, %p68
      %p71 = scmp.ne.s32.totalorder %s54, %s70
      %p72 = scmp.eq.s32.totalorder %s20, 0
      %p73 = por %p71, %p72
      %s74 = ssub.s32 %s14, %s21
      %p75 = scmp.eq.s32.totalorder %s74, 0
      %s77 = sadd.s32 %s76, 1
      %s78 = scalar_select %p75, %s76, %s77
      %p81 = pneg %p75
      %p82 = scmp.eq.s32.totalorder %s14, 1
      %p83 = por %p81, %p82
      %p84 = scmp.ne.s32.totalorder %s76, %s79
      %p85 = scmp.eq.s32.totalorder %s14, 0
      %p86 = por %p84, %p85
      %p87 = scmp.ne.s32.totalorder %s76, %s79
      %p88 = scmp.eq.s32.totalorder %s19, 1
      %p89 = por %p87, %p88
      %p90 = scmp.ne.s32.totalorder %s79, %s80
      %p91 = scmp.eq.s32.totalorder %s19, 0
      %p92 = por %p90, %p91
      %p93 = scmp.ne.s32.totalorder %s79, %s80
      %p94 = scmp.eq.s32.totalorder %s20, 1
      %p95 = por %p93, %p94
      %p97 = scmp.ne.s32.totalorder %s80, %s96
      %p98 = scmp.eq.s32.totalorder %s20, 0
      %p99 = por %p97, %p98
      %p100 = scmp.le.s32.totalorder 1, %s14
      %p101 = scmp.lt.s32.totalorder %s14, 3
      %p102 = pnand %p100, %p101
      %p103 = pneg %p102
      // Predicated region
      $region9: #{tpu_custom_call.1} parent=5 // pred_check
        _
      $region10: #{tpu_custom_call.1} parent=5 // pred_check_branch
        %105 = sbr.rel (%p102) target = $region12
      $region11: #{tpu_custom_call.1} parent=5 // pred_region
        %s106 = ssub.s32 %s14, 1
      $region12: #{tpu_custom_call.1} parent=5 // pred_fallthru
        _
      %p107 = scmp.lt.s32.totalorder %s14, 2
      // Predicated region
      $region13: #{tpu_custom_call.1} parent=5 // pred_check
        %p108 = pneg %p107
      $region14: #{tpu_custom_call.1} parent=5 // pred_check_branch
        %110 = sbr.rel (%p108) target = $region16
      $region15: #{tpu_custom_call.1} parent=5 // pred_region
        // Predicated region
        $region17: #{tpu_custom_call.1} parent=15 // pred_check
          %p111 = pneg %p34
        $region18: #{tpu_custom_call.1} parent=15 // pred_check_branch
          %113 = sbr.rel (%p111) target = $region20
        $region19: #{tpu_custom_call.1} parent=15 // pred_region
          %s114 = sand.u32 %s24, 1
          %s115 = scalar_lea.sflag [#allocation3], %s114
          %s116 = sand.u32 %s24, 1
          %s117 = smul.addr %s116, 8
          %s118 = scalar_lea.vmem [#allocation2], %s117
          %120 = vsyncadd %s115, 0
          %s121 = smul.addr %s14, 8
          %s122 = scalar_lea.hbm %s0, %s121
          %s124 = sshll.u32 %s122, 4
          %s125 = int_to_ptr.hbm [resolvable:$true] %s124
          %s126 = sshll.u32 %s118, 4
          %s127 = int_to_ptr.vmem [resolvable:$true] %s126
          %129 = dma.hbm_to_vmem [thread:$0]  %s125, 128, %s127, %s115
        $region20: #{tpu_custom_call.1} parent=15 // pred_fallthru
          _
        // Predicated region
        $region21: #{tpu_custom_call.1} parent=15 // pred_check
          %p130 = pneg %p60
        $region22: #{tpu_custom_call.1} parent=15 // pred_check_branch
          %132 = sbr.rel (%p130) target = $region24
        $region23: #{tpu_custom_call.1} parent=15 // pred_region
          %s133 = sand.u32 %s50, 1
          %s134 = scalar_lea.sflag [#allocation5], %s133
          %s135 = sand.u32 %s50, 1
          %s136 = smul.addr %s135, 8
          %s137 = scalar_lea.vmem [#allocation4], %s136
          %139 = vsyncadd %s134, 0
          %s140 = smul.addr %s14, 8
          %s141 = scalar_lea.hbm %s1, %s140
          %s143 = sshll.u32 %s141, 4
          %s144 = int_to_ptr.hbm [resolvable:$true] %s143
          %s145 = sshll.u32 %s137, 4
          %s146 = int_to_ptr.vmem [resolvable:$true] %s145
          %148 = dma.hbm_to_vmem [thread:$0]  %s144, 128, %s146, %s134
        $region24: #{tpu_custom_call.1} parent=15 // pred_fallthru
          _
      $region16: #{tpu_custom_call.1} parent=5 // pred_fallthru
        _
      %p149 = scmp.le.s32.totalorder 1, %s14
      %p150 = scmp.lt.s32.totalorder %s14, 3
      %p151 = pnand %p149, %p150
      %p152 = pneg %p151
      // Predicated region
      $region25: #{tpu_custom_call.1} parent=5 // pred_check
        _
      $region26: #{tpu_custom_call.1} parent=5 // pred_check_branch
        %154 = sbr.rel (%p151) target = $region28
      $region27: #{tpu_custom_call.1} parent=5 // pred_region
        %s155 = ssub.s32 %s14, 1
        %s156 = sand.u32 %s27, 1
        %s157 = scalar_lea.sflag [#allocation3], %s156
        %s158 = sand.u32 %s27, 1
        %s159 = smul.addr %s158, 8
        %s160 = scalar_lea.vmem [#allocation2], %s159
        // Predicated region
        $region29: #{tpu_custom_call.1} parent=27 // pred_check
          %p161 = pneg %p40
        $region30: #{tpu_custom_call.1} parent=27 // pred_check_branch
          %163 = sbr.rel (%p161) target = $region32
        $region31: #{tpu_custom_call.1} parent=27 // pred_region
          %165 = dma.done %s157, 128
        $region32: #{tpu_custom_call.1} parent=27 // pred_fallthru
          _
        %s166 = sand.u32 %s53, 1
        %s167 = scalar_lea.sflag [#allocation5], %s166
        %s168 = sand.u32 %s53, 1
        %s169 = smul.addr %s168, 8
        %s170 = scalar_lea.vmem [#allocation4], %s169
        // Predicated region
        $region33: #{tpu_custom_call.1} parent=27 // pred_check
          %p171 = pneg %p66
        $region34: #{tpu_custom_call.1} parent=27 // pred_check_branch
          %173 = sbr.rel (%p171) target = $region36
        $region35: #{tpu_custom_call.1} parent=27 // pred_region
          %175 = dma.done %s167, 128
        $region36: #{tpu_custom_call.1} parent=27 // pred_fallthru
          _
        %s176 = sand.u32 %s27, 1
        %s177 = scalar_lea.sflag [#allocation3], %s176
        %s178 = sand.u32 %s27, 1
        %s179 = smul.addr %s178, 8
        %s180 = scalar_lea.vmem [#allocation2], %s179
        %p181 = pneg %p40
        %p182 = pneg %p37
        %s183 = sand.u32 %s53, 1
        %s184 = scalar_lea.sflag [#allocation5], %s183
        %s185 = sand.u32 %s53, 1
        %s186 = smul.addr %s185, 8
        %s187 = scalar_lea.vmem [#allocation4], %s186
        %p188 = pneg %p66
        %p189 = pneg %p63
        %p190 = pneg %p92
        %p191 = pneg %p89
        %p192 = scmp.lt.s32.totalorder %s19, 1
        %s193 = scalar_select %p192, %s19, 1
        %s194 = smul.addr %s193, 8
        %s195 = scalar_lea.vmem %s2, %s194
        %p196 = scmp.lt.s32.totalorder %s19, 1
        %s197 = scalar_select %p196, %s19, 1
        %s198 = smul.addr %s197, 8
        %s199 = scalar_lea.vmem %s2, %s198
        %v200 = vld [vmem:[%s160] sm:$0xff]
        %v201 = vld [vmem:[%s170] sm:$0xff]
        %vm202 = vcmask 261120
        %v203 = vsel %vm202, %v201, -inf
        %204 = vmax.xlane.f32.xlu0 %v203
        %v205 = vpop.xlane.xlu0 %204
        %v206 = vsub.f32 %v201, %v205
        %v207 = vmul.f32 %v206, 1.442695
        %v208 = vpow.pop %v207
        %v209 = vsel %vm202, %v208, 0.0
        %210 = vadd.xlane.f32.xlu0 %v209
        %v211 = vpop.xlane.xlu0 %210
        %v212 = vsel %vm202, %v200, -inf
        %213 = vmax.xlane.f32.xlu0 %v212
        %v214 = vpop.xlane.xlu0 %213
        %v215 = vsub.f32 %v200, %v214
        %v216 = vmul.f32 %v215, 1.442695
        %v217 = vpow.pop %v216
        %v218 = vsel %vm202, %v217, 0.0
        %219 = vadd.xlane.f32.xlu0 %v218
        %v220 = vpop.xlane.xlu0 %219
        %v221 = vlog2.pop %v220
        %v222 = vmul.f32 %v221, 0.6931472
        %v223 = vsub.f32 %v215, %v222
        %v224 = vmul.f32 %v208, %v223
        %v225 = vsel %vm202, %v224, 0.0
        %226 = vadd.xlane.f32.xlu0 %v225
        %v227 = vpop.xlane.xlu0 %226
        %v228 = vrcp.pop %v211
        %v229 = vmul.f32 %v211, %v228
        %v230 = vsub.f32 1.0, %v229
        %v231 = vmul.f32 %v228, %v230
        %v232 = vadd.f32 %v228, %v231
        %vm233 = vweird.f32 %v211
        %vm234 = vweird.f32 %v228
        %vm235 = vmor %vm233, %vm234
        %v236 = vsel %vm235, %v228, %v232
        %v237 = vand.u32 2147483647, %v211
        %vm238 = vcmp.eq.f32.partialorder %v237, 8.507059e+37
        %v239 = vand.u32 %v211, 2147483648
        %v240 = vor.u32 1.1754944e-38, %v239
        %v241 = vsel %vm238, %v240, %v236
        %v242 = vmul.f32 %v227, %v241
        %v243 = vsub.f32 0.0, %v242
        %vm244 = vcmask 7168
        %245 = vst.msk [vmem:[%s199] sm:$0xff] %vm244, %v243
        %p246 = scmp.lt.s32.totalorder %s19, 1
        %s247 = scalar_select %p246, %s19, 1
        %s248 = smul.addr %s247, 8
        %s249 = scalar_lea.vmem %s2, %s248
        // Predicated region
        $region37: #{tpu_custom_call.1} parent=27 // pred_check
          %p250 = pneg %p89
        $region38: #{tpu_custom_call.1} parent=27 // pred_check_branch
          %252 = sbr.rel (%p250) target = $region40
        $region39: #{tpu_custom_call.1} parent=27 // pred_region
          _
        $region40: #{tpu_custom_call.1} parent=27 // pred_fallthru
          _
      $region28: #{tpu_custom_call.1} parent=5 // pred_fallthru
        _
      %p253 = scmp.le.s32.totalorder 2, %s14
      // Predicated region
      $region41: #{tpu_custom_call.1} parent=5 // pred_check
        %p254 = pneg %p253
      $region42: #{tpu_custom_call.1} parent=5 // pred_check_branch
        %256 = sbr.rel (%p254) target = $region44
      $region43: #{tpu_custom_call.1} parent=5 // pred_region
        %s257 = ssub.s32 %s14, 2
        // Predicated region
        $region45: #{tpu_custom_call.1} parent=43 // pred_check
          %p258 = pneg %p95
        $region46: #{tpu_custom_call.1} parent=43 // pred_check_branch
          %260 = sbr.rel (%p258) target = $region48
        $region47: #{tpu_custom_call.1} parent=43 // pred_region
          %p261 = scmp.lt.s32.totalorder %s20, 1
          %s262 = scalar_select %p261, %s20, 1
          %s263 = smul.addr %s262, 8
          %s264 = scalar_lea.vmem %s2, %s263
        $region48: #{tpu_custom_call.1} parent=43 // pred_fallthru
          _
      $region44: #{tpu_custom_call.1} parent=5 // pred_fallthru
        _
    $region6: #{tpu_custom_call.1} parent=1 // loop_footer
      %s18 = sadd.s32 1, %s14
    $region7: #{tpu_custom_call.1} parent=1 // loop_footer_branch
      %13 = sbr.rel target = $region3
    $region8: #{tpu_custom_call.1} parent=1 // loop_exit
      _
    %265 = vsyncpa [#allocation3], 1
    %s266 = scalar_lea.sflag [#allocation3], 1
    %267 = vsyncpa %s266, 1
    %268 = vsyncpa [#allocation5], 1
    %s269 = scalar_lea.sflag [#allocation5], 1
    %270 = vsyncpa %s269, 1

</llo_original>
